<compile_context>
chip_gen: v7x
topology: tpu7x:2x2x1
jax: 0.10.0
libtpu: 0.0.40
codegen_flags: <defaults>
</compile_context>

<pallas_src>
import functools
import math

import jax
import jax.numpy as jnp
from jax import lax
from jax.experimental import pallas as pl
from jax.experimental.pallas import tpu as pltpu


# ----------------------------------------------------------------------------
# Kernels
# ----------------------------------------------------------------------------
def _conv_kernel(x_ref, w_ref, pb_ref, y_ref):
    """Conv row tile: one MXU dot (th*Wo, Kpad) @ (Kpad, Cpad) + bias."""
    _, th, wo, kpad = x_ref.shape
    cpad = y_ref.shape[-1]
    x = x_ref[0].reshape(th * wo, kpad)                        # bf16 patches
    acc = jnp.dot(x, w_ref[...], preferred_element_type=jnp.float32)
    acc = acc + pb_ref[0:1, :]                                 # + bias (f32)
    y_ref[0] = acc.reshape(th, wo, cpad).astype(y_ref.dtype)


def _conv_stats_kernel(x_ref, w_ref, pb_ref, y_ref, st_ref, *, cout, num_groups):
    """Conv row tile + per-channel GroupNorm statistics.

    Grid is (batch, row_tile).  The row-tile axis is innermost and marked
    "arbitrary", so for a fixed batch the tiles run sequentially and the
    (8, Cpad) stats block (constant block index across that axis) stays
    resident in VMEM:
        row 0 = sum(y - shift), row 1 = sum((y - shift)^2),
        row 2 = shift (per-group mean of the first tile, broadcast per chan).
    """
    t = pl.program_id(1)
    _, th, wo, kpad = x_ref.shape
    cpad = y_ref.shape[-1]
    cg = cout // num_groups

    x = x_ref[0].reshape(th * wo, kpad)
    acc = jnp.dot(x, w_ref[...], preferred_element_type=jnp.float32)
    acc = acc + pb_ref[0:1, :]
    y_ref[0] = acc.reshape(th, wo, cpad)

    ch = lax.broadcasted_iota(jnp.int32, (1, cpad), 1)

    @pl.when(t == 0)
    def _():
        # Shift = per-group mean of this first tile ((1, Cpad) math only);
        # keeps the sum-of-squares accumulation well conditioned.
        tile_sum = jnp.sum(acc, axis=0, keepdims=True)
        shift = jnp.zeros((1, cpad), jnp.float32)
        inv_nt = 1.0 / float(th * wo * cg)
        for g in range(num_groups):                            # tiny unroll
            in_g = jnp.logical_and(ch >= g * cg, ch < (g + 1) * cg)
            m_g = jnp.sum(jnp.where(in_g, tile_sum, 0.0)) * inv_nt
            shift = jnp.where(in_g, m_g, shift)
        st_ref[0] = jnp.zeros((8, cpad), jnp.float32)
        st_ref[0, 2:3, :] = shift

    shift = st_ref[0, 2:3, :]
    centered = acc - shift
    st_ref[0, 0:1, :] = st_ref[0, 0:1, :] + jnp.sum(centered, axis=0, keepdims=True)
    st_ref[0, 1:2, :] = st_ref[0, 1:2, :] + jnp.sum(centered * centered, axis=0,
                                                    keepdims=True)


def _norm_act_kernel(y_ref, aff_ref, o_ref, *, neg_slope):
    """Fused GroupNorm affine + LeakyReLU(0.2) on one conv row tile."""
    y = y_ref[0]                                               # (th, Wo, Cpad) f32
    scale = aff_ref[0, 0:1, :].reshape(1, 1, -1)
    shift = aff_ref[0, 1:2, :].reshape(1, 1, -1)
    z = y * scale + shift
    o_ref[0] = jnp.maximum(z, neg_slope * z).astype(o_ref.dtype)


# ----------------------------------------------------------------------------
# JAX-side glue
# ----------------------------------------------------------------------------
def _pick_row_tile(ho, wo, cpad, max_tile_bytes=128 * 1024):
    """Largest divisor of Ho (preferring multiples of 8) whose f32 output tile
    (th * Wo * Cpad * 4 bytes) stays within max_tile_bytes."""
    cap = max(1, max_tile_bytes // (wo * cpad * 4))
    divisors = [d for d in range(1, ho + 1) if ho % d == 0 and d <= cap]
    mult8 = [d for d in divisors if d % 8 == 0]
    return max(mult8) if mult8 else max(divisors)


def _im2col(x_nchw, ksize, stride, padding, ho, wo, kpad):
    """NCHW -> lane-dense bf16 patches (B, Ho, Wo, Kpad).

    Patch channel order is (kh, kw, Cin) flattened (matches the packed weight
    matrix); the last dim is zero-padded to Kpad (a multiple of 128)."""
    cin = x_nchw.shape[1]
    x = jnp.transpose(x_nchw, (0, 2, 3, 1)).astype(jnp.bfloat16)
    xp = jnp.pad(x, ((0, 0), (padding, padding), (padding, padding), (0, 0)))
    taps = []
    for dh in range(ksize):
        for dw in range(ksize):
            taps.append(xp[:, dh:dh + (ho - 1) * stride + 1:stride,
                           dw:dw + (wo - 1) * stride + 1:stride, :])
    patches = jnp.concatenate(taps, axis=-1)                   # (B, Ho, Wo, K*K*Cin)
    kkc = ksize * ksize * cin
    if kpad > kkc:
        patches = jnp.pad(patches, ((0, 0), (0, 0), (0, 0), (0, kpad - kkc)))
    return patches


def _vmem_limit(*block_bytes, headroom=2 << 20):
    need = 2 * sum(block_bytes) + headroom                     # double-buffered blocks
    return int(min(48 * 2**20, max(16 * 2**20, need)))         # safe on v5e/v6e/v7x


def basic_conv2d(x_nchw, params, *, stride=1, padding=1, act_norm=False,
                 transpose=False, num_groups=2, eps=1e-5, neg_slope=0.2,
                 row_tile=None, out_dtype=jnp.float32):
    """Pallas BasicConv2d forward.  Input/output are NCHW like the module."""
    if transpose:
        # TODO(synk): ConvTranspose2d (transpose=True) path not implemented.
        raise NotImplementedError("transpose=True is not supported")

    w = params["w"]                       # (Kpad, Cpad) bf16 packed weights
    pb = params["pb"]                     # (8, Cpad) f32: rows 0/1/2 = bias/gamma/beta
    cout, cin, ksize = (params["w_pt"].shape[0], params["w_pt"].shape[1],
                        params["w_pt"].shape[-1])
    kpad, cpad = w.shape
    assert cout % num_groups == 0, (cout, num_groups)

    B, C_in, H, W = x_nchw.shape
    assert C_in == cin, (C_in, cin)
    Ho = (H + 2 * padding - ksize) // stride + 1
    Wo = (W + 2 * padding - ksize) // stride + 1

    patches = _im2col(x_nchw, ksize, stride, padding, Ho, Wo, kpad)

    th = _pick_row_tile(Ho, Wo, cpad) if row_tile is None else row_tile
    assert Ho % th == 0, (Ho, th)
    grid = (B, Ho // th)

    patch_spec = pl.BlockSpec((1, th, Wo, kpad), lambda b, t: (b, t, 0, 0))
    w_spec = pl.BlockSpec((kpad, cpad), lambda b, t: (0, 0))
    pb_spec = pl.BlockSpec((8, cpad), lambda b, t: (0, 0))
    ytile_spec = pl.BlockSpec((1, th, Wo, cpad), lambda b, t: (b, t, 0, 0))

    blk_patch = th * Wo * kpad * 2
    blk_w = kpad * cpad * 2 + 8 * cpad * 4
    blk_y32 = th * Wo * cpad * 4
    blk_out = th * Wo * cpad * jnp.dtype(out_dtype).itemsize

    if not act_norm:
        out = pl.pallas_call(
            _conv_kernel,
            out_shape=jax.ShapeDtypeStruct((B, Ho, Wo, cpad), out_dtype),
            grid=grid,
            in_specs=[patch_spec, w_spec, pb_spec],
            out_specs=ytile_spec,
            compiler_params=pltpu.CompilerParams(
                dimension_semantics=("parallel", "parallel"),
                vmem_limit_bytes=_vmem_limit(blk_patch, blk_w, blk_out, blk_y32)),
        )(patches, w, pb)
    else:
        stats_spec = pl.BlockSpec((1, 8, cpad), lambda b, t: (b, 0, 0))
        # Pass 1: conv tiles (f32) + resident per-image stats block.
        y32, stats = pl.pallas_call(
            functools.partial(_conv_stats_kernel, cout=cout, num_groups=num_groups),
            out_shape=(jax.ShapeDtypeStruct((B, Ho, Wo, cpad), jnp.float32),
                       jax.ShapeDtypeStruct((B, 8, cpad), jnp.float32)),
            grid=grid,
            in_specs=[patch_spec, w_spec, pb_spec],
            out_specs=(ytile_spec, stats_spec),
            compiler_params=pltpu.CompilerParams(
                # Batch axis parallel (megacore); the row-tile/statistics axis
                # must stay sequential ("arbitrary") for the resident stats.
                dimension_semantics=("parallel", "arbitrary"),
                vmem_limit_bytes=_vmem_limit(blk_patch, blk_w, 2 * blk_y32,
                                             8 * cpad * 4)),
        )(patches, w, pb)

        # Tiny per-(batch, group) reduction + affine fold in plain JAX.
        cg = cout // num_groups
        n_g = float(Ho * Wo * cg)
        s_c = stats[:, 0, :]                       # (B, Cpad) sum(y - shift)
        q_c = stats[:, 1, :]                       # (B, Cpad) sum((y - shift)^2)
        shift_c = stats[:, 2, :]                   # (B, Cpad) per-group shift
        ch = jnp.arange(cpad)
        onehot = jnp.where((ch[None, :] // cg == jnp.arange(num_groups)[:, None])
                           & (ch[None, :] < cout), 1.0, 0.0)          # (G, Cpad)
        s_g = (s_c @ onehot.T) / n_g               # (B, G)  E[y - shift]
        q_g = (q_c @ onehot.T) / n_g               # (B, G)  E[(y - shift)^2]
        var_g = jnp.maximum(q_g - s_g * s_g, 0.0)  # shifted -> well conditioned
        rstd_g = lax.rsqrt(var_g + eps)
        rstd_c = rstd_g @ onehot                   # (B, Cpad)
        mean_c = shift_c + s_g @ onehot            # (B, Cpad)
        gamma = pb[1][None, :]
        beta = pb[2][None, :]
        scale = rstd_c * gamma
        offset = beta - mean_c * scale
        aff = jnp.zeros((B, 8, cpad), jnp.float32)
        aff = aff.at[:, 0, :].set(scale)
        aff = aff.at[:, 1, :].set(offset)

        # Pass 2: per-row-tile normalize + LeakyReLU (fully parallel grid).
        out = pl.pallas_call(
            functools.partial(_norm_act_kernel, neg_slope=neg_slope),
            out_shape=jax.ShapeDtypeStruct((B, Ho, Wo, cpad), out_dtype),
            grid=grid,
            in_specs=[ytile_spec, stats_spec],
            out_specs=ytile_spec,
            compiler_params=pltpu.CompilerParams(
                dimension_semantics=("parallel", "parallel"),
                vmem_limit_bytes=_vmem_limit(blk_y32, blk_out, 8 * cpad * 4)),
        )(y32, aff)

    # Drop channel padding, back to NCHW like the PyTorch module.
    return jnp.transpose(out[..., :cout], (0, 3, 1, 2))


# ----------------------------------------------------------------------------
# Parameter init (PyTorch-like uniform bounds) + kernel-ready packing
# ----------------------------------------------------------------------------
def init_basic_conv2d_params(key, in_channels, out_channels, kernel_size=3):
    kw, kb = jax.random.split(key)
    fan_in = in_channels * kernel_size * kernel_size
    bound = 1.0 / math.sqrt(fan_in)
    w_pt = jax.random.uniform(
        kw, (out_channels, in_channels, kernel_size, kernel_size),
        jnp.float32, -bound, bound)
    b = jax.random.uniform(kb, (out_channels,), jnp.float32, -bound, bound)
    gamma = jnp.ones((out_channels,), jnp.float32)
    beta = jnp.zeros((out_channels,), jnp.float32)

    # Cout padded to a lane-dense multiple of 128.  (If out_channels ever
    # exceeds 128, pad to a multiple of 256 on v6e/v7x to fill the MXU.)
    cpad = max(128, ((out_channels + 127) // 128) * 128)
    kkc = kernel_size * kernel_size * in_channels
    kpad = max(128, ((kkc + 127) // 128) * 128)
    # (Cout, Cin, kh, kw) -> (kh*kw*Cin, Cout), zero-pad to (Kpad, Cpad), bf16.
    w_mat = jnp.transpose(w_pt, (2, 3, 1, 0)).reshape(kkc, out_channels)
    w_mat = jnp.pad(w_mat, ((0, kpad - kkc), (0, cpad - out_channels)))
    w_mat = w_mat.astype(jnp.bfloat16)
    pb = jnp.zeros((8, cpad), jnp.float32)
    pb = pb.at[0, :out_channels].set(b)
    pb = pb.at[1, :out_channels].set(gamma)
    pb = pb.at[2, :out_channels].set(beta)
    return dict(w=w_mat, pb=pb, w_pt=w_pt, b=b, gamma=gamma, beta=beta)


# ----------------------------------------------------------------------------
# Pure-JAX reference (matches the PyTorch module; bf16 conv operands, f32 accum)
# ----------------------------------------------------------------------------
def basic_conv2d_reference(x_nchw, params, *, stride=1, padding=1,
                           act_norm=False, num_groups=2, eps=1e-5,
                           neg_slope=0.2):
    w = params["w_pt"].astype(jnp.bfloat16)
    y = lax.conv_general_dilated(
        x_nchw.astype(jnp.bfloat16), w, window_strides=(stride, stride),
        padding=((padding, padding), (padding, padding)),
        dimension_numbers=("NCHW", "OIHW", "NCHW"),
        preferred_element_type=jnp.float32)
    y = y + params["b"].reshape(1, -1, 1, 1)
    if act_norm:
        B, C, H, W = y.shape
        g = y.reshape(B, num_groups, C // num_groups, H, W)
        m = jnp.mean(g, axis=(2, 3, 4), keepdims=True)
        v = jnp.mean((g - m) ** 2, axis=(2, 3, 4), keepdims=True)
        g = (g - m) * lax.rsqrt(v + eps)
        y = (g.reshape(B, C, H, W) * params["gamma"].reshape(1, -1, 1, 1)
             + params["beta"].reshape(1, -1, 1, 1))
        y = jnp.where(y >= 0, y, neg_slope * y)
    return y


if __name__ == "__main__":
    key = jax.random.PRNGKey(0)
    B, C_in, H, W = 2, 4, 16, 16
    C_out = 8

    key, kx, kp1, kp2 = jax.random.split(key, 4)
    x = jax.random.normal(kx, (B, C_in, H, W), jnp.float32)
    p1 = init_basic_conv2d_params(kp1, C_in, C_out)
    p2 = init_basic_conv2d_params(kp2, C_out, C_out)

    # stride-1 conv + GroupNorm(2) + LeakyReLU(0.2); row_tile=8 -> 2 row tiles
    # (exercises the resident-stats accumulation path).
    f1 = jax.jit(functools.partial(basic_conv2d, stride=1, act_norm=True,
                                   row_tile=8))
    # stride-2 conv + GroupNorm + LeakyReLU.
    f2 = jax.jit(functools.partial(basic_conv2d, stride=2, act_norm=True))
    # conv only (the module's default path), bf16 output (half the HBM bytes).
    f3 = jax.jit(functools.partial(basic_conv2d, stride=1, act_norm=False,
                                   out_dtype=jnp.bfloat16))

    y1 = f1(x, p1)
    y2 = f2(y1, p2)
    y3 = f3(x, p1)
    jax.block_until_ready((y1, y2, y3))

    assert y1.shape == (B, C_out, H, W), y1.shape
    assert y2.shape == (B, C_out, H // 2, W // 2), y2.shape
    assert y3.shape == (B, C_out, H, W) and y3.dtype == jnp.bfloat16, (
        y3.shape, y3.dtype)

    # numerical check against the pure-JAX reference
    r1 = basic_conv2d_reference(x, p1, stride=1, act_norm=True)
    r2 = basic_conv2d_reference(y1, p2, stride=2, act_norm=True)
    r3 = basic_conv2d_reference(x, p1, stride=1, act_norm=False)
    checks = ((y1, r1, 2e-3), (y2, r2, 2e-3), (y3, r3, 2e-2))  # y3 is bf16
    for got, want, tol in checks:
        err = float(jnp.max(jnp.abs(got.astype(jnp.float32) - want)))
        assert err < tol, err

    print("KERNEL_OK")
</pallas_src>

<mosaic_0001>
module attributes {stable_mosaic.version = 11 : i64} {
  func.func @_conv_stats_kernel(%arg0: i32, %arg1: i32, %arg2: memref<1x8x16x128xbf16, #tpu.memory_space<vmem>>, %arg3: memref<128x128xbf16, #tpu.memory_space<vmem>>, %arg4: memref<8x128xf32, #tpu.memory_space<vmem>>, %arg5: memref<1x8x16x128xf32, #tpu.memory_space<vmem>>, %arg6: memref<1x8x128xf32, #tpu.memory_space<vmem>>) attributes {dimension_semantics = [#tpu.dimension_semantics<parallel>, #tpu.dimension_semantics<arbitrary>], iteration_bounds = array<i64: 2, 2>, scalar_prefetch = 0 : i64, scratch_operands = 0 : i64, tpu.core_type = #tpu.core_type<tc>, window_params = [{transform_indices = @transform_0, window_bounds = array<i64: 1, 8, 16, 128>}, {pipeline_mode = #tpu.pipeline_mode<synchronous>, transform_indices = @transform_1, window_bounds = array<i64: 128, 128>}, {pipeline_mode = #tpu.pipeline_mode<synchronous>, transform_indices = @transform_2, window_bounds = array<i64: 8, 128>}, {transform_indices = @transform_3, window_bounds = array<i64: 1, 8, 16, 128>}, {transform_indices = @transform_4, window_bounds = array<i64: 1, 8, 128>}]} {
    %c0 = arith.constant 0 : index
    %c0_0 = arith.constant 0 : index
    %c0_1 = arith.constant 0 : index
    %c0_2 = arith.constant 0 : index
    %0 = vector.load %arg2[%c0, %c0_0, %c0_1, %c0_2] : memref<1x8x16x128xbf16, #tpu.memory_space<vmem>>, vector<1x8x16x128xbf16>
    %1 = vector.shape_cast %0 : vector<1x8x16x128xbf16> to vector<8x16x128xbf16>
    %2 = vector.shape_cast %1 : vector<8x16x128xbf16> to vector<128x128xbf16>
    %c0_3 = arith.constant 0 : index
    %c0_4 = arith.constant 0 : index
    %3 = vector.load %arg3[%c0_3, %c0_4] : memref<128x128xbf16, #tpu.memory_space<vmem>>, vector<128x128xbf16>
    %cst = arith.constant dense<0.000000e+00> : vector<128x128xf32>
    %4 = tpu.matmul %2, %3, %cst {dimension_numbers = #tpu.dot_dimension_numbers<[1], [0], [0], [1], [0, 0, 1, 1], [], []>} : vector<128x128xbf16>, vector<128x128xbf16>, vector<128x128xf32> -> vector<128x128xf32>
    %c0_5 = arith.constant 0 : index
    %c0_6 = arith.constant 0 : index
    %5 = vector.load %arg4[%c0_5, %c0_6] : memref<8x128xf32, #tpu.memory_space<vmem>>, vector<1x128xf32>
    %6 = vector.broadcast %5 : vector<1x128xf32> to vector<128x128xf32>
    %7 = arith.addf %4, %6 : vector<128x128xf32>
    %8 = vector.shape_cast %7 : vector<128x128xf32> to vector<8x16x128xf32>
    %c0_7 = arith.constant 0 : index
    %c0_8 = arith.constant 0 : index
    %c0_9 = arith.constant 0 : index
    %c0_10 = arith.constant 0 : index
    %9 = vector.load %arg5[%c0_7, %c0_8, %c0_9, %c0_10] : memref<1x8x16x128xf32, #tpu.memory_space<vmem>>, vector<1x8x16x128xf32>
    %10 = vector.shape_cast %9 : vector<1x8x16x128xf32> to vector<8x16x128xf32>
    %11 = vector.shape_cast %8 : vector<8x16x128xf32> to vector<1x8x16x128xf32>
    tpu.vector_store %arg5[%c0_7, %c0_8, %c0_9, %c0_10], %11 {strides = array<i32>} : memref<1x8x16x128xf32, #tpu.memory_space<vmem>>, vector<1x8x16x128xf32>,
    %12 = tpu.iota {dimensions = array<i32: 1>} : vector<1x128xi32>
    %c0_i32 = arith.constant 0 : i32
    %13 = arith.cmpi eq, %arg1, %c0_i32 : i32
    %14 = arith.extui %13 : i1 to i32
    %c0_i32_11 = arith.constant 0 : i32
    %15 = arith.cmpi ne, %14, %c0_i32_11 : i32
    scf.if %15 {
      %cst_27 = arith.constant dense<0.000000e+00> : vector<128xf32>
      %37 = vector.multi_reduction <add>, %7, %cst_27 [0] : vector<128x128xf32> to vector<128xf32>
      %38 = vector.shape_cast %37 : vector<128xf32> to vector<1x128xf32>
      %cst_28 = arith.constant 0.000000e+00 : f32
      %39 = vector.broadcast %cst_28 : f32 to vector<1x128xf32>
      %c0_i32_29 = arith.constant 0 : i32
      %40 = vector.broadcast %c0_i32_29 : i32 to vector<1x128xi32>
      %41 = arith.cmpi sge, %12, %40 : vector<1x128xi32>
      %c4_i32 = arith.constant 4 : i32
      %42 = vector.broadcast %c4_i32 : i32 to vector<1x128xi32>
      %43 = arith.cmpi slt, %12, %42 : vector<1x128xi32>
      %44 = arith.andi %41, %43 : vector<1x128xi1>
      %cst_30 = arith.constant 0.000000e+00 : f32
      %45 = vector.broadcast %cst_30 : f32 to vector<1x128xf32>
      %46 = arith.select %44, %38, %45 : vector<1x128xi1>, vector<1x128xf32>
      %47 = vector.shape_cast %46 : vector<1x128xf32> to vector<1x1x128xf32>
      %cst_31 = arith.constant dense<0.000000e+00> : vector<1xf32>
      %48 = vector.multi_reduction <add>, %47, %cst_31 [1, 2] : vector<1x1x128xf32> to vector<1xf32>
      %49 = vector.shape_cast %48 : vector<1xf32> to vector<1x1x1xf32>
      %50 = vector.extract %49[0, 0, 0] : f32 from vector<1x1x1xf32>
      %cst_32 = arith.constant 0.001953125 : f32
      %51 = arith.mulf %50, %cst_32 : f32
      %52 = vector.broadcast %51 : f32 to vector<1x128xf32>
      %53 = arith.select %44, %52, %39 : vector<1x128xi1>, vector<1x128xf32>
      %c4_i32_33 = arith.constant 4 : i32
      %54 = vector.broadcast %c4_i32_33 : i32 to vector<1x128xi32>
      %55 = arith.cmpi sge, %12, %54 : vector<1x128xi32>
      %c8_i32 = arith.constant 8 : i32
      %56 = vector.broadcast %c8_i32 : i32 to vector<1x128xi32>
      %57 = arith.cmpi slt, %12, %56 : vector<1x128xi32>
      %58 = arith.andi %55, %57 : vector<1x128xi1>
      %cst_34 = arith.constant 0.000000e+00 : f32
      %59 = vector.broadcast %cst_34 : f32 to vector<1x128xf32>
      %60 = arith.select %58, %38, %59 : vector<1x128xi1>, vector<1x128xf32>
      %61 = vector.shape_cast %60 : vector<1x128xf32> to vector<1x1x128xf32>
      %cst_35 = arith.constant dense<0.000000e+00> : vector<1xf32>
      %62 = vector.multi_reduction <add>, %61, %cst_35 [1, 2] : vector<1x1x128xf32> to vector<1xf32>
      %63 = vector.shape_cast %62 : vector<1xf32> to vector<1x1x1xf32>
      %64 = vector.extract %63[0, 0, 0] : f32 from vector<1x1x1xf32>
      %cst_36 = arith.constant 0.001953125 : f32
      %65 = arith.mulf %64, %cst_36 : f32
      %66 = vector.broadcast %65 : f32 to vector<1x128xf32>
      %67 = arith.select %58, %66, %53 : vector<1x128xi1>, vector<1x128xf32>
      %cst_37 = arith.constant 0.000000e+00 : f32
      %68 = vector.broadcast %cst_37 : f32 to vector<8x128xf32>
      %c0_38 = arith.constant 0 : index
      %c0_39 = arith.constant 0 : index
      %c0_40 = arith.constant 0 : index
      %69 = vector.load %arg6[%c0_38, %c0_39, %c0_40] : memref<1x8x128xf32, #tpu.memory_space<vmem>>, vector<1x8x128xf32>
      %70 = vector.shape_cast %69 : vector<1x8x128xf32> to vector<8x128xf32>
      %71 = vector.shape_cast %68 : vector<8x128xf32> to vector<1x8x128xf32>
      tpu.vector_store %arg6[%c0_38, %c0_39, %c0_40], %71 {strides = array<i32>} : memref<1x8x128xf32, #tpu.memory_space<vmem>>, vector<1x8x128xf32>,
      %c0_41 = arith.constant 0 : index
      %c2_42 = arith.constant 2 : index
      %c0_43 = arith.constant 0 : index
      %72 = vector.load %arg6[%c0_41, %c2_42, %c0_43] : memref<1x8x128xf32, #tpu.memory_space<vmem>>, vector<1x1x128xf32>
      %73 = vector.shape_cast %72 : vector<1x1x128xf32> to vector<1x128xf32>
      %74 = vector.shape_cast %67 : vector<1x128xf32> to vector<1x1x128xf32>
      tpu.vector_store %arg6[%c0_41, %c2_42, %c0_43], %74 {strides = array<i32>} : memref<1x8x128xf32, #tpu.memory_space<vmem>>, vector<1x1x128xf32>,
    } else {
    }
    %c0_12 = arith.constant 0 : index
    %c2 = arith.constant 2 : index
    %c0_13 = arith.constant 0 : index
    %16 = vector.load %arg6[%c0_12, %c2, %c0_13] : memref<1x8x128xf32, #tpu.memory_space<vmem>>, vector<1x1x128xf32>
    %17 = vector.shape_cast %16 : vector<1x1x128xf32> to vector<1x128xf32>
    %18 = vector.broadcast %17 : vector<1x128xf32> to vector<128x128xf32>
    %19 = arith.subf %7, %18 : vector<128x128xf32>
    %c0_14 = arith.constant 0 : index
    %c0_15 = arith.constant 0 : index
    %c0_16 = arith.constant 0 : index
    %20 = vector.load %arg6[%c0_14, %c0_15, %c0_16] : memref<1x8x128xf32, #tpu.memory_space<vmem>>, vector<1x1x128xf32>
    %21 = vector.shape_cast %20 : vector<1x1x128xf32> to vector<1x128xf32>
    %cst_17 = arith.constant dense<0.000000e+00> : vector<128xf32>
    %22 = vector.multi_reduction <add>, %19, %cst_17 [0] : vector<128x128xf32> to vector<128xf32>
    %23 = vector.shape_cast %22 : vector<128xf32> to vector<1x128xf32>
    %24 = arith.addf %21, %23 : vector<1x128xf32>
    %c0_18 = arith.constant 0 : index
    %c0_19 = arith.constant 0 : index
    %c0_20 = arith.constant 0 : index
    %25 = vector.load %arg6[%c0_18, %c0_19, %c0_20] : memref<1x8x128xf32, #tpu.memory_space<vmem>>, vector<1x1x128xf32>
    %26 = vector.shape_cast %25 : vector<1x1x128xf32> to vector<1x128xf32>
    %27 = vector.shape_cast %24 : vector<1x128xf32> to vector<1x1x128xf32>
    tpu.vector_store %arg6[%c0_18, %c0_19, %c0_20], %27 {strides = array<i32>} : memref<1x8x128xf32, #tpu.memory_space<vmem>>, vector<1x1x128xf32>,
    %c0_21 = arith.constant 0 : index
    %c1 = arith.constant 1 : index
    %c0_22 = arith.constant 0 : index
    %28 = vector.load %arg6[%c0_21, %c1, %c0_22] : memref<1x8x128xf32, #tpu.memory_space<vmem>>, vector<1x1x128xf32>
    %29 = vector.shape_cast %28 : vector<1x1x128xf32> to vector<1x128xf32>
    %30 = arith.mulf %19, %19 : vector<128x128xf32>
    %cst_23 = arith.constant dense<0.000000e+00> : vector<128xf32>
    %31 = vector.multi_reduction <add>, %30, %cst_23 [0] : vector<128x128xf32> to vector<128xf32>
    %32 = vector.shape_cast %31 : vector<128xf32> to vector<1x128xf32>
    %33 = arith.addf %29, %32 : vector<1x128xf32>
    %c0_24 = arith.constant 0 : index
    %c1_25 = arith.constant 1 : index
    %c0_26 = arith.constant 0 : index
    %34 = vector.load %arg6[%c0_24, %c1_25, %c0_26] : memref<1x8x128xf32, #tpu.memory_space<vmem>>, vector<1x1x128xf32>
    %35 = vector.shape_cast %34 : vector<1x1x128xf32> to vector<1x128xf32>
    %36 = vector.shape_cast %33 : vector<1x128xf32> to vector<1x1x128xf32>
    tpu.vector_store %arg6[%c0_24, %c1_25, %c0_26], %36 {strides = array<i32>} : memref<1x8x128xf32, #tpu.memory_space<vmem>>, vector<1x1x128xf32>,
    return
  }
  func.func @transform_0(%arg0: i32, %arg1: i32) -> (i32, i32, i32, i32) {
    %c0_i32 = arith.constant 0 : i32
    %c0_i32_0 = arith.constant 0 : i32
    %c0_i32_1 = arith.constant 0 : i32
    return %arg0, %arg1, %c0_i32, %c0_i32_0 : i32, i32, i32, i32
  }
  func.func @transform_1(%arg0: i32, %arg1: i32) -> (i32, i32) {
    %c0_i32 = arith.constant 0 : i32
    %c0_i32_0 = arith.constant 0 : i32
    %c0_i32_1 = arith.constant 0 : i32
    return %c0_i32, %c0_i32_0 : i32, i32
  }
  func.func @transform_2(%arg0: i32, %arg1: i32) -> (i32, i32) {
    %c0_i32 = arith.constant 0 : i32
    %c0_i32_0 = arith.constant 0 : i32
    %c0_i32_1 = arith.constant 0 : i32
    return %c0_i32, %c0_i32_0 : i32, i32
  }
  func.func @transform_3(%arg0: i32, %arg1: i32) -> (i32, i32, i32, i32) {
    %c0_i32 = arith.constant 0 : i32
    %c0_i32_0 = arith.constant 0 : i32
    %c0_i32_1 = arith.constant 0 : i32
    return %arg0, %arg1, %c0_i32, %c0_i32_0 : i32, i32, i32, i32
  }
  func.func @transform_4(%arg0: i32, %arg1: i32) -> (i32, i32, i32) {
    %c0_i32 = arith.constant 0 : i32
    %c0_i32_0 = arith.constant 0 : i32
    %c0_i32_1 = arith.constant 0 : i32
    return %arg0, %c0_i32, %c0_i32_0 : i32, i32, i32
  }
}

module attributes {stable_mosaic.version = 11 : i64} {
  func.func @_norm_act_kernel(%arg0: i32, %arg1: i32, %arg2: memref<1x8x16x128xf32, #tpu.memory_space<vmem>>, %arg3: memref<1x8x128xf32, #tpu.memory_space<vmem>>, %arg4: memref<1x8x16x128xf32, #tpu.memory_space<vmem>>) attributes {dimension_semantics = [#tpu.dimension_semantics<parallel>, #tpu.dimension_semantics<parallel>], iteration_bounds = array<i64: 2, 2>, scalar_prefetch = 0 : i64, scratch_operands = 0 : i64, tpu.core_type = #tpu.core_type<tc>, window_params = [{transform_indices = @transform_0, window_bounds = array<i64: 1, 8, 16, 128>}, {transform_indices = @transform_1, window_bounds = array<i64: 1, 8, 128>}, {transform_indices = @transform_2, window_bounds = array<i64: 1, 8, 16, 128>}]} {
    %c0 = arith.constant 0 : index
    %c0_0 = arith.constant 0 : index
    %c0_1 = arith.constant 0 : index
    %c0_2 = arith.constant 0 : index
    %0 = vector.load %arg2[%c0, %c0_0, %c0_1, %c0_2] : memref<1x8x16x128xf32, #tpu.memory_space<vmem>>, vector<1x8x16x128xf32>
    %1 = vector.shape_cast %0 : vector<1x8x16x128xf32> to vector<8x16x128xf32>
    %c0_3 = arith.constant 0 : index
    %c0_4 = arith.constant 0 : index
    %c0_5 = arith.constant 0 : index
    %2 = vector.load %arg3[%c0_3, %c0_4, %c0_5] : memref<1x8x128xf32, #tpu.memory_space<vmem>>, vector<1x1x128xf32>
    %3 = vector.shape_cast %2 : vector<1x1x128xf32> to vector<1x128xf32>
    %4 = vector.shape_cast %3 : vector<1x128xf32> to vector<1x1x128xf32>
    %c0_6 = arith.constant 0 : index
    %c1 = arith.constant 1 : index
    %c0_7 = arith.constant 0 : index
    %5 = vector.load %arg3[%c0_6, %c1, %c0_7] : memref<1x8x128xf32, #tpu.memory_space<vmem>>, vector<1x1x128xf32>
    %6 = vector.shape_cast %5 : vector<1x1x128xf32> to vector<1x128xf32>
    %7 = vector.shape_cast %6 : vector<1x128xf32> to vector<1x1x128xf32>
    %8 = vector.broadcast %4 : vector<1x1x128xf32> to vector<8x16x128xf32>
    %9 = arith.mulf %1, %8 : vector<8x16x128xf32>
    %10 = vector.broadcast %7 : vector<1x1x128xf32> to vector<8x16x128xf32>
    %11 = arith.addf %9, %10 : vector<8x16x128xf32>
    %cst = arith.constant 2.000000e-01 : f32
    %12 = vector.broadcast %cst : f32 to vector<8x16x128xf32>
    %13 = arith.mulf %12, %11 : vector<8x16x128xf32>
    %14 = arith.maximumf %11, %13 : vector<8x16x128xf32>
    %c0_8 = arith.constant 0 : index
    %c0_9 = arith.constant 0 : index
    %c0_10 = arith.constant 0 : index
    %c0_11 = arith.constant 0 : index
    %15 = vector.load %arg4[%c0_8, %c0_9, %c0_10, %c0_11] : memref<1x8x16x128xf32, #tpu.memory_space<vmem>>, vector<1x8x16x128xf32>
    %16 = vector.shape_cast %15 : vector<1x8x16x128xf32> to vector<8x16x128xf32>
    %17 = vector.shape_cast %14 : vector<8x16x128xf32> to vector<1x8x16x128xf32>
    tpu.vector_store %arg4[%c0_8, %c0_9, %c0_10, %c0_11], %17 {strides = array<i32>} : memref<1x8x16x128xf32, #tpu.memory_space<vmem>>, vector<1x8x16x128xf32>,
    return
  }
  func.func @transform_0(%arg0: i32, %arg1: i32) -> (i32, i32, i32, i32) {
    %c0_i32 = arith.constant 0 : i32
    %c0_i32_0 = arith.constant 0 : i32
    %c0_i32_1 = arith.constant 0 : i32
    return %arg0, %arg1, %c0_i32, %c0_i32_0 : i32, i32, i32, i32
  }
  func.func @transform_1(%arg0: i32, %arg1: i32) -> (i32, i32, i32) {
    %c0_i32 = arith.constant 0 : i32
    %c0_i32_0 = arith.constant 0 : i32
    %c0_i32_1 = arith.constant 0 : i32
    return %arg0, %c0_i32, %c0_i32_0 : i32, i32, i32
  }
  func.func @transform_2(%arg0: i32, %arg1: i32) -> (i32, i32, i32, i32) {
    %c0_i32 = arith.constant 0 : i32
    %c0_i32_0 = arith.constant 0 : i32
    %c0_i32_1 = arith.constant 0 : i32
    return %arg0, %arg1, %c0_i32, %c0_i32_0 : i32, i32, i32, i32
  }
}

</mosaic_0001>

<llo_original>
// kernel: basic_conv2d.2
$region0: #{basic_conv2d.2}
  #allocation0 [shape = 'u32[]', space=smem, size = 0x4, offset = 0x4, fixed_abs, tag = 'smem constant byte address 0x4 - core index']
  #allocation1 [shape = 'u32[144,128]{1,0:T(1,128)}', space=vmem, size = 0x12000, scoped, tag = 'internal scratch']
  %s0 = inlined_call_operand.vmem [shape: bf16[2,16,16,128], index: 0, kind: input, shape index: {}]
  %s1 = inlined_call_operand.vmem [shape: bf16[128,128], index: 1, kind: input, shape index: {}]
  %s2 = inlined_call_operand.vmem [shape: f32[8,128], index: 2, kind: input, shape index: {}]
  %s3 = inlined_call_operand.vmem [shape: f32[2,16,16,128], index: 3, kind: output, shape index: {0}]
  %s4 = inlined_call_operand.vmem [shape: f32[2,8,128], index: 4, kind: output, shape index: {1}]
  %5 = xla_tuple %s3, %s4
  %s6 = sld [smem:[#allocation0]]
  $region57: #{basic_conv2d.2} parent=0
    _
  %s8 = ssub.s32 1, %s6
  %s9 = scalar_select 0, %s8, %s6
  loop: start=0, step=1, limit=6
  $region2: #{basic_conv2d.2} parent=0 // loop_pre_header
    _
  $region3: #{basic_conv2d.2} parent=0 // loop_header
    %s11 = sphi 0, %s15
    %p12 = scmp.ge.s32.totalorder %s11, 6
    %s18 = sphi 0, %s30
    %s19 = sphi 0, %s26
    %s20 = sphi 0, %s18
    %s21 = sphi 0, %s19
    %s22 = sphi 0, %s20
    %s23 = sphi 0, %s21
    %s35 = sphi 0, %s37
    %s38 = sphi 0, %s35
    %s39 = sphi 0, %s38
    %s55 = sphi 0, %s39
    %s59 = sphi 0, %s59
    %s61 = sphi 0, %s59
    %s62 = sphi 0, %s61
    %s76 = sphi 0, %s62
    %s80 = sphi 0, %s80
    %s82 = sphi 0, %s80
    %s83 = sphi 0, %s82
    %s97 = sphi 0, %s83
    %s105 = sphi 0, %s107
    %s108 = sphi 0, %s105
    %s109 = sphi 0, %s108
    %s125 = sphi 0, %s109
    %s131 = sphi 0, %s133
    %s134 = sphi 0, %s131
    %s135 = sphi 0, %s134
    %s151 = sphi 0, %s135
  $region4: #{basic_conv2d.2} parent=0 // loop_header_branch
    %14 = sbr.rel (%p12) target = $region8
  $region5: #{basic_conv2d.2} parent=0 // loop_body
    %s16 = ssub.s32 %s11, 1
    %s17 = ssub.s32 %s11, 2
    %s24 = sadd.s32 1, %s19
    %p25 = scmp.ge.s32.totalorder %s24, 2
    %s26 = scalar_select %p25, 0, %s24
    %s27 = sadd.s32 1, %s18
    %s28 = scalar_select %p25, %s27, %s18
    %p29 = scmp.ge.s32.totalorder %s28, 2
    %s30 = scalar_select %p29, 0, %s28
    %s31 = ssub.s32 %s18, %s30
    %s32 = ssub.s32 %s19, %s26
    %s33 = sor.u32 %s31, %s32
    %p34 = scmp.eq.s32.totalorder %s33, 0
    %s36 = sadd.s32 %s35, 1
    %s37 = scalar_select %p34, %s35, %s36
    %p40 = pneg %p34
    %p41 = scmp.eq.s32.totalorder %s11, 3
    %p42 = por %p40, %p41
    %p43 = scmp.ne.s32.totalorder %s35, %s38
    %p44 = scmp.eq.s32.totalorder %s11, 0
    %p45 = por %p43, %p44
    %p46 = scmp.ne.s32.totalorder %s35, %s38
    %p47 = scmp.eq.s32.totalorder %s16, 3
    %p48 = por %p46, %p47
    %p49 = scmp.ne.s32.totalorder %s38, %s39
    %p50 = scmp.eq.s32.totalorder %s16, 0
    %p51 = por %p49, %p50
    %p52 = scmp.ne.s32.totalorder %s38, %s39
    %p53 = scmp.eq.s32.totalorder %s17, 3
    %p54 = por %p52, %p53
    %p56 = scmp.ne.s32.totalorder %s39, %s55
    %p57 = scmp.eq.s32.totalorder %s17, 0
    %p58 = por %p56, %p57
    %s60 = sadd.s32 %s59, 1
    %p63 = scmp.eq.s32.totalorder %s11, 3
    %p64 = scmp.ne.s32.totalorder %s59, %s61
    %p65 = scmp.eq.s32.totalorder %s11, 0
    %p66 = por %p64, %p65
    %p67 = scmp.ne.s32.totalorder %s59, %s61
    %p68 = scmp.eq.s32.totalorder %s16, 3
    %p69 = por %p67, %p68
    %p70 = scmp.ne.s32.totalorder %s61, %s62
    %p71 = scmp.eq.s32.totalorder %s16, 0
    %p72 = por %p70, %p71
    %p73 = scmp.ne.s32.totalorder %s61, %s62
    %p74 = scmp.eq.s32.totalorder %s17, 3
    %p75 = por %p73, %p74
    %p77 = scmp.ne.s32.totalorder %s62, %s76
    %p78 = scmp.eq.s32.totalorder %s17, 0
    %p79 = por %p77, %p78
    %s81 = sadd.s32 %s80, 1
    %p84 = scmp.eq.s32.totalorder %s11, 3
    %p85 = scmp.ne.s32.totalorder %s80, %s82
    %p86 = scmp.eq.s32.totalorder %s11, 0
    %p87 = por %p85, %p86
    %p88 = scmp.ne.s32.totalorder %s80, %s82
    %p89 = scmp.eq.s32.totalorder %s16, 3
    %p90 = por %p88, %p89
    %p91 = scmp.ne.s32.totalorder %s82, %s83
    %p92 = scmp.eq.s32.totalorder %s16, 0
    %p93 = por %p91, %p92
    %p94 = scmp.ne.s32.totalorder %s82, %s83
    %p95 = scmp.eq.s32.totalorder %s17, 3
    %p96 = por %p94, %p95
    %p98 = scmp.ne.s32.totalorder %s83, %s97
    %p99 = scmp.eq.s32.totalorder %s17, 0
    %p100 = por %p98, %p99
    %s101 = ssub.s32 %s18, %s30
    %s102 = ssub.s32 %s19, %s26
    %s103 = sor.u32 %s101, %s102
    %p104 = scmp.eq.s32.totalorder %s103, 0
    %s106 = sadd.s32 %s105, 1
    %s107 = scalar_select %p104, %s105, %s106
    %p110 = pneg %p104
    %p111 = scmp.eq.s32.totalorder %s11, 3
    %p112 = por %p110, %p111
    %p113 = scmp.ne.s32.totalorder %s105, %s108
    %p114 = scmp.eq.s32.totalorder %s11, 0
    %p115 = por %p113, %p114
    %p116 = scmp.ne.s32.totalorder %s105, %s108
    %p117 = scmp.eq.s32.totalorder %s16, 3
    %p118 = por %p116, %p117
    %p119 = scmp.ne.s32.totalorder %s108, %s109
    %p120 = scmp.eq.s32.totalorder %s16, 0
    %p121 = por %p119, %p120
    %p122 = scmp.ne.s32.totalorder %s108, %s109
    %p123 = scmp.eq.s32.totalorder %s17, 3
    %p124 = por %p122, %p123
    %p126 = scmp.ne.s32.totalorder %s109, %s125
    %p127 = scmp.eq.s32.totalorder %s17, 0
    %p128 = por %p126, %p127
    %s129 = ssub.s32 %s18, %s30
    %p130 = scmp.eq.s32.totalorder %s129, 0
    %s132 = sadd.s32 %s131, 1
    %s133 = scalar_select %p130, %s131, %s132
    %p136 = pneg %p130
    %p137 = scmp.eq.s32.totalorder %s11, 3
    %p138 = por %p136, %p137
    %p139 = scmp.ne.s32.totalorder %s131, %s134
    %p140 = scmp.eq.s32.totalorder %s11, 0
    %p141 = por %p139, %p140
    %p142 = scmp.ne.s32.totalorder %s131, %s134
    %p143 = scmp.eq.s32.totalorder %s16, 3
    %p144 = por %p142, %p143
    %p145 = scmp.ne.s32.totalorder %s134, %s135
    %p146 = scmp.eq.s32.totalorder %s16, 0
    %p147 = por %p145, %p146
    %p148 = scmp.ne.s32.totalorder %s134, %s135
    %p149 = scmp.eq.s32.totalorder %s17, 3
    %p150 = por %p148, %p149
    %p152 = scmp.ne.s32.totalorder %s135, %s151
    %p153 = scmp.eq.s32.totalorder %s17, 0
    %p154 = por %p152, %p153
    %p155 = scmp.le.s32.totalorder 1, %s11
    %p156 = scmp.lt.s32.totalorder %s11, 5
    %p157 = pnand %p155, %p156
    %p158 = pneg %p157
    // Predicated region
    $region9: #{basic_conv2d.2} parent=5 // pred_check
      _
    $region10: #{basic_conv2d.2} parent=5 // pred_check_branch
      %160 = sbr.rel (%p157) target = $region12
    $region11: #{basic_conv2d.2} parent=5 // pred_region
      %s161 = ssub.s32 %s11, 1
      // Predicated region
      $region13: #{basic_conv2d.2} parent=11 // pred_check
        %p162 = pneg %p72
      $region14: #{basic_conv2d.2} parent=11 // pred_check_branch
        %164 = sbr.rel (%p162) target = $region16
      $region15: #{basic_conv2d.2} parent=11 // pred_region
        _
      $region16: #{basic_conv2d.2} parent=11 // pred_fallthru
        _
      // Predicated region
      $region17: #{basic_conv2d.2} parent=11 // pred_check
        %p165 = pneg %p93
      $region18: #{basic_conv2d.2} parent=11 // pred_check_branch
        %167 = sbr.rel (%p165) target = $region20
      $region19: #{basic_conv2d.2} parent=11 // pred_region
        _
      $region20: #{basic_conv2d.2} parent=11 // pred_fallthru
        _
    $region12: #{basic_conv2d.2} parent=5 // pred_fallthru
      _
    %p168 = scmp.lt.s32.totalorder %s11, 4
    // Predicated region
    $region21: #{basic_conv2d.2} parent=5 // pred_check
      %p169 = pneg %p168
    $region22: #{basic_conv2d.2} parent=5 // pred_check_branch
      %171 = sbr.rel (%p169) target = $region24
    $region23: #{basic_conv2d.2} parent=5 // pred_region
      // Predicated region
      $region25: #{basic_conv2d.2} parent=23 // pred_check
        %p172 = pneg %p45
      $region26: #{basic_conv2d.2} parent=23 // pred_check_branch
        %174 = sbr.rel (%p172) target = $region28
      $region27: #{basic_conv2d.2} parent=23 // pred_region
        %s175 = smul.u32 8, %s19
        %p176 = scmp.lt.s32.totalorder %s18, 1
        %s177 = scalar_select %p176, %s18, 1
        %p178 = scmp.lt.s32.totalorder %s175, 15
        %s179 = scalar_select %p178, %s175, 15
        %s180 = smul.addr %s179, 2
        %s181 = smul.addr %s177, 32
        %s182 = sadd.s32 %s180, %s181
        %s183 = smul.addr %s182, 4
        %s184 = scalar_lea.vmem %s0, %s183
        %s185 = smul.u32 8, %s19
      $region28: #{basic_conv2d.2} parent=23 // pred_fallthru
        _
    $region24: #{basic_conv2d.2} parent=5 // pred_fallthru
      _
    %p186 = scmp.le.s32.totalorder 1, %s11
    %p187 = scmp.lt.s32.totalorder %s11, 5
    %p188 = pnand %p186, %p187
    %p189 = pneg %p188
    // Predicated region
    $region29: #{basic_conv2d.2} parent=5 // pred_check
      _
    $region30: #{basic_conv2d.2} parent=5 // pred_check_branch
      %191 = sbr.rel (%p188) target = $region32
    $region31: #{basic_conv2d.2} parent=5 // pred_region
      %s192 = ssub.s32 %s11, 1
      %s193 = smul.u32 8, %s21
      %p194 = scmp.lt.s32.totalorder %s20, 1
      %s195 = scalar_select %p194, %s20, 1
      %p196 = scmp.lt.s32.totalorder %s193, 15
      %s197 = scalar_select %p196, %s193, 15
      %s198 = smul.addr %s197, 2
      %s199 = smul.addr %s195, 32
      %s200 = sadd.s32 %s198, %s199
      %s201 = smul.addr %s200, 4
      %s202 = scalar_lea.vmem %s0, %s201
      %p203 = pneg %p51
      %p204 = pneg %p48
      %p205 = pneg %p72
      %p206 = pneg %p69
      %p207 = pneg %p93
      %p208 = pneg %p90
      %p209 = pneg %p121
      %p210 = pneg %p118
      %s211 = smul.u32 8, %s21
      %p212 = scmp.lt.s32.totalorder %s20, 1
      %s213 = scalar_select %p212, %s20, 1
      %p214 = scmp.lt.s32.totalorder %s211, 15
      %s215 = scalar_select %p214, %s211, 15
      %s216 = smul.addr %s215, 2
      %s217 = smul.addr %s213, 32
      %s218 = sadd.s32 %s216, %s217
      %s219 = smul.addr %s218, 8
      %s220 = scalar_lea.vmem %s3, %s219
      %p221 = pneg %p147
      %p222 = pneg %p144
      %p223 = scmp.lt.s32.totalorder %s20, 1
      %s224 = scalar_select %p223, %s20, 1
      %s225 = smul.addr %s224, 8
      %s226 = scalar_lea.vmem %s4, %s225
      %s227 = smul.u32 8, %s21
      %p228 = scmp.lt.s32.totalorder %s20, 1
      %s229 = scalar_select %p228, %s20, 1
      %p230 = scmp.lt.s32.totalorder %s227, 15
      %s231 = scalar_select %p230, %s227, 15
      %s232 = smul.addr %s231, 2
      %s233 = smul.addr %s229, 32
      %s234 = sadd.s32 %s232, %s233
      %s235 = smul.addr %s234, 4
      %s236 = scalar_lea.vmem %s0, %s235
      %s237 = smul.u32 8, %s21
      %s238 = smul.u32 8, %s21
      %p239 = scmp.lt.s32.totalorder %s20, 1
      %s240 = scalar_select %p239, %s20, 1
      %p241 = scmp.lt.s32.totalorder %s238, 15
      %s242 = scalar_select %p241, %s238, 15
      %s243 = smul.addr %s242, 2
      %s244 = smul.addr %s240, 32
      %s245 = sadd.s32 %s243, %s244
      %s246 = smul.addr %s245, 8
      %s247 = scalar_lea.vmem %s3, %s246
      %s248 = smul.u32 8, %s21
      %p249 = scmp.lt.s32.totalorder %s20, 1
      %s250 = scalar_select %p249, %s20, 1
      %s251 = smul.addr %s250, 8
      %s252 = scalar_lea.vmem %s4, %s251
      %v254 = vld [vmem:[%s236] sm:$0xf]
      %v255 = vld [vmem:[%s236 + $0x4] sm:$0xf]
      %v256 = vld [vmem:[%s236 + $0x8] sm:$0xf]
      %v257 = vld [vmem:[%s236 + $0xc] sm:$0xf]
      %v258 = vld [vmem:[%s236 + $0x10] sm:$0xf]
      %v259 = vld [vmem:[%s236 + $0x14] sm:$0xf]
      %v260 = vld [vmem:[%s236 + $0x18] sm:$0xf]
      %v261 = vld [vmem:[%s236 + $0x1c] sm:$0xf]
      %v262 = vld [vmem:[%s236 + $0x20] sm:$0xf]
      %v263 = vld [vmem:[%s236 + $0x24] sm:$0xf]
      %v264 = vld [vmem:[%s236 + $0x28] sm:$0xf]
      %v265 = vld [vmem:[%s236 + $0x2c] sm:$0xf]
      %v266 = vld [vmem:[%s236 + $0x30] sm:$0xf]
      %v267 = vld [vmem:[%s236 + $0x34] sm:$0xf]
      %v268 = vld [vmem:[%s236 + $0x38] sm:$0xf]
      %v269 = vld [vmem:[%s236 + $0x3c] sm:$0xf]
      %v270 = vld [vmem:[%s1] sm:$0xf]
      %v271 = vld [vmem:[%s1 + $0x4] sm:$0xf]
      %v272 = vld [vmem:[%s1 + $0x8] sm:$0xf]
      %v273 = vld [vmem:[%s1 + $0xc] sm:$0xf]
      %v274 = vld [vmem:[%s1 + $0x10] sm:$0xf]
      %v275 = vld [vmem:[%s1 + $0x14] sm:$0xf]
      %v276 = vld [vmem:[%s1 + $0x18] sm:$0xf]
      %v277 = vld [vmem:[%s1 + $0x1c] sm:$0xf]
      %v278 = vld [vmem:[%s1 + $0x20] sm:$0xf]
      %v279 = vld [vmem:[%s1 + $0x24] sm:$0xf]
      %v280 = vld [vmem:[%s1 + $0x28] sm:$0xf]
      %v281 = vld [vmem:[%s1 + $0x2c] sm:$0xf]
      %v282 = vld [vmem:[%s1 + $0x30] sm:$0xf]
      %v283 = vld [vmem:[%s1 + $0x34] sm:$0xf]
      %v284 = vld [vmem:[%s1 + $0x38] sm:$0xf]
      %v285 = vld [vmem:[%s1 + $0x3c] sm:$0xf]
      %v286 = vld [vmem:[%s2] sm:$0x1]
      %v287 = vlaneseq
      %v288 = vshrl.u32 %v287, 7
      %v289 = vsub.s32 0, %v288
      %v290 = vrot.slane %v286, %v289
      %v307 = vunpack.c.l.b16 %v254
      %v308 = vunpack.c.l.b16 %v255
      %v309 = vunpack.c.l.b16 %v256
      %v310 = vunpack.c.l.b16 %v257
      %v311 = vunpack.c.l.b16 %v258
      %v312 = vunpack.c.l.b16 %v259
      %v313 = vunpack.c.l.b16 %v260
      %v314 = vunpack.c.l.b16 %v261
      %v315 = vunpack.c.l.b16 %v262
      %v316 = vunpack.c.l.b16 %v263
      %v317 = vunpack.c.l.b16 %v264
      %v318 = vunpack.c.l.b16 %v265
      %v319 = vunpack.c.l.b16 %v266
      %v320 = vunpack.c.l.b16 %v267
      %v321 = vunpack.c.l.b16 %v268
      %v322 = vunpack.c.l.b16 %v269
      %v323 = vpack.c.b16 %v308, %v307
      %v324 = vpack.c.b16 %v310, %v309
      %v325 = vpack.c.b16 %v312, %v311
      %v326 = vpack.c.b16 %v314, %v313
      %v327 = vpack.c.b16 %v316, %v315
      %v328 = vpack.c.b16 %v318, %v317
      %v329 = vpack.c.b16 %v320, %v319
      %v330 = vpack.c.b16 %v322, %v321
      %v355 = vunpack.c.l.b16 %v270
      %v356 = vunpack.c.l.b16 %v271
      %v357 = vunpack.c.l.b16 %v272
      %v358 = vunpack.c.l.b16 %v273
      %v359 = vunpack.c.l.b16 %v274
      %v360 = vunpack.c.l.b16 %v275
      %v361 = vunpack.c.l.b16 %v276
      %v362 = vunpack.c.l.b16 %v277
      %v363 = vunpack.c.l.b16 %v278
      %v364 = vunpack.c.l.b16 %v279
      %v365 = vunpack.c.l.b16 %v280
      %v366 = vunpack.c.l.b16 %v281
      %v367 = vunpack.c.l.b16 %v282
      %v368 = vunpack.c.l.b16 %v283
      %v369 = vunpack.c.l.b16 %v284
      %v370 = vunpack.c.l.b16 %v285
      %v371 = vpack.c.b16 %v356, %v355
      %v372 = vpack.c.b16 %v358, %v357
      %v373 = vpack.c.b16 %v360, %v359
      %v374 = vpack.c.b16 %v362, %v361
      %v375 = vpack.c.b16 %v364, %v363
      %v376 = vpack.c.b16 %v366, %v365
      %v377 = vpack.c.b16 %v368, %v367
      %v378 = vpack.c.b16 %v370, %v369
      %387 = vmatprep.subr.bf16.mxu0 0
      %388 = vmatpush1.bf16.msra.mxu0 %v371
      %389 = vmatprep.subr.bf16.mxu0 0
      %390 = vmatpush1.bf16.msra.mxu0 %v372
      %391 = vmatprep.subr.bf16.mxu0 0
      %392 = vmatpush1.bf16.msra.mxu0 %v373
      %393 = vmatprep.subr.bf16.mxu0 0
      %394 = vmatpush1.bf16.msra.mxu0 %v374
      %395 = vmatprep.subr.bf16.mxu0 0
      %396 = vmatpush1.bf16.msra.mxu0 %v375
      %397 = vmatprep.subr.bf16.mxu0 0
      %398 = vmatpush1.bf16.msra.mxu0 %v376
      %399 = vmatprep.subr.bf16.mxu0 0
      %400 = vmatpush1.bf16.msra.mxu0 %v377
      %401 = vmatprep.subr.bf16.mxu0 0
      %402 = vmatpush1.bf16.msra.mxu0 %v378
      %403 = vmatprep.subr.bf16.mxu0 0
      %404 = vmatpush1.bf16.msra.mxu0 0
      %405 = vmatprep.subr.bf16.mxu0 0
      %406 = vmatpush1.bf16.msra.mxu0 0
      %407 = vmatprep.subr.bf16.mxu0 0
      %408 = vmatpush1.bf16.msra.mxu0 0
      %409 = vmatprep.subr.bf16.mxu0 0
      %410 = vmatpush1.bf16.msra.mxu0 0
      %411 = vmatprep.subr.bf16.mxu0 0
      %412 = vmatpush1.bf16.msra.mxu0 0
      %413 = vmatprep.subr.bf16.mxu0 0
      %414 = vmatpush1.bf16.msra.mxu0 0
      %415 = vmatprep.subr.bf16.mxu0 0
      %416 = vmatpush1.bf16.msra.mxu0 0
      %417 = vmatprep.subr.bf16.mxu0 0
      %418 = vmatpush1.bf16.msra.mxu0 0
      %419 = vmatprep.mubr.bf16.mxu0 0
      %420 = vmatmul.mubr.bf16.gmra.mrb[0].mxu0 %v323
      %v421 = vpop.f32.mrb[0].mxu0
      %v422 = vadd.f32 %v290, %v421
      %v423 = vpop.f32.mrb[0].mxu0
      %v424 = vpop.f32.mrb[0].mxu0
      %v425 = vadd.f32 %v290, %v424
      %v426 = vpop.f32.mrb[0].mxu0
      %427 = vmatprep.mubr.bf16.mxu0 0
      %428 = vmatmul.mubr.bf16.gmra.mrb[0].mxu0 %v324
      %v429 = vpop.f32.mrb[0].mxu0
      %v430 = vadd.f32 %v290, %v429
      %v431 = vpop.f32.mrb[0].mxu0
      %v432 = vpop.f32.mrb[0].mxu0
      %v433 = vadd.f32 %v290, %v432
      %v434 = vpop.f32.mrb[0].mxu0
      %435 = vmatprep.mubr.bf16.mxu0 0
      %436 = vmatmul.mubr.bf16.gmra.mrb[0].mxu0 %v325
      %v437 = vpop.f32.mrb[0].mxu0
      %v438 = vadd.f32 %v290, %v437
      %v439 = vpop.f32.mrb[0].mxu0
      %v440 = vpop.f32.mrb[0].mxu0
      %v441 = vadd.f32 %v290, %v440
      %v442 = vpop.f32.mrb[0].mxu0
      %443 = vmatprep.mubr.bf16.mxu0 0
      %444 = vmatmul.mubr.bf16.gmra.mrb[0].mxu0 %v326
      %v445 = vpop.f32.mrb[0].mxu0
      %v446 = vadd.f32 %v290, %v445
      %v447 = vpop.f32.mrb[0].mxu0
      %v448 = vpop.f32.mrb[0].mxu0
      %v449 = vadd.f32 %v290, %v448
      %v450 = vpop.f32.mrb[0].mxu0
      %451 = vmatprep.mubr.bf16.mxu0 0
      %452 = vmatmul.mubr.bf16.gmra.mrb[0].mxu0 %v327
      %v453 = vpop.f32.mrb[0].mxu0
      %v454 = vadd.f32 %v290, %v453
      %v455 = vpop.f32.mrb[0].mxu0
      %v456 = vpop.f32.mrb[0].mxu0
      %v457 = vadd.f32 %v290, %v456
      %v458 = vpop.f32.mrb[0].mxu0
      %459 = vmatprep.mubr.bf16.mxu0 0
      %460 = vmatmul.mubr.bf16.gmra.mrb[0].mxu0 %v328
      %v461 = vpop.f32.mrb[0].mxu0
      %v462 = vadd.f32 %v290, %v461
      %v463 = vpop.f32.mrb[0].mxu0
      %v464 = vpop.f32.mrb[0].mxu0
      %v465 = vadd.f32 %v290, %v464
      %v466 = vpop.f32.mrb[0].mxu0
      %467 = vmatprep.mubr.bf16.mxu0 0
      %468 = vmatmul.mubr.bf16.gmra.mrb[0].mxu0 %v329
      %v469 = vpop.f32.mrb[0].mxu0
      %v470 = vadd.f32 %v290, %v469
      %v471 = vpop.f32.mrb[0].mxu0
      %v472 = vpop.f32.mrb[0].mxu0
      %v473 = vadd.f32 %v290, %v472
      %v474 = vpop.f32.mrb[0].mxu0
      %475 = vmatprep.mubr.bf16.mxu0 0
      %476 = vmatmul.mubr.bf16.gmra.mrb[0].mxu0 %v330
      %v477 = vpop.f32.mrb[0].mxu0
      %v478 = vadd.f32 %v290, %v477
      %v479 = vpop.f32.mrb[0].mxu0
      %v480 = vpop.f32.mrb[0].mxu0
      %v481 = vadd.f32 %v290, %v480
      %v482 = vpop.f32.mrb[0].mxu0
      %483 = vdwg.mxu0
      %484 = vst [vmem:[%s247] sm:$0xff] %v422
      %485 = vst [vmem:[%s247 + $0x8] sm:$0xff] %v425
      %486 = vst [vmem:[%s247 + $0x10] sm:$0xff] %v430
      %487 = vst [vmem:[%s247 + $0x18] sm:$0xff] %v433
      %488 = vst [vmem:[%s247 + $0x20] sm:$0xff] %v438
      %489 = vst [vmem:[%s247 + $0x28] sm:$0xff] %v441
      %490 = vst [vmem:[%s247 + $0x30] sm:$0xff] %v446
      %491 = vst [vmem:[%s247 + $0x38] sm:$0xff] %v449
      %492 = vst [vmem:[%s247 + $0x40] sm:$0xff] %v454
      %493 = vst [vmem:[%s247 + $0x48] sm:$0xff] %v457
      %494 = vst [vmem:[%s247 + $0x50] sm:$0xff] %v462
      %495 = vst [vmem:[%s247 + $0x58] sm:$0xff] %v465
      %496 = vst [vmem:[%s247 + $0x60] sm:$0xff] %v470
      %497 = vst [vmem:[%s247 + $0x68] sm:$0xff] %v473
      %498 = vst [vmem:[%s247 + $0x70] sm:$0xff] %v478
      %499 = vst [vmem:[%s247 + $0x78] sm:$0xff] %v481
      %v500 = vlaneseq
      %v501 = vand.u32 %v500, 127
      %p502 = scmp.eq.s32.totalorder %s21, 0
      // Predicated region
      $region33: #{basic_conv2d.2} parent=31 // pred_check
        %p503 = pneg %p502
      $region34: #{basic_conv2d.2} parent=31 // pred_check_branch
        %505 = sbr.rel (%p503) target = $region36
      $region35: #{basic_conv2d.2} parent=31 // pred_region
        %v506 = vadd.f32 %v422, %v425
        %v507 = vadd.f32 %v506, %v430
        %v508 = vadd.f32 %v507, %v433
        %v509 = vadd.f32 %v508, %v438
        %v510 = vadd.f32 %v509, %v441
        %v511 = vadd.f32 %v510, %v446
        %v512 = vadd.f32 %v511, %v449
        %v513 = vadd.f32 %v512, %v454
        %v514 = vadd.f32 %v513, %v457
        %v515 = vadd.f32 %v514, %v462
        %v516 = vadd.f32 %v515, %v465
        %v517 = vadd.f32 %v516, %v470
        %v518 = vadd.f32 %v517, %v473
        %v519 = vadd.f32 %v518, %v478
        %v520 = vadd.f32 %v519, %v481
        %v521 = vrot.slane %v520, 4
        %v522 = vadd.f32 %v520, %v521
        %v523 = vrot.slane %v522, 2
        %v524 = vadd.f32 %v522, %v523
        %v525 = vrot.slane %v524, 1
        %v526 = vadd.f32 %v524, %v525
        %vm527 = vcmp.ge.s32.totalorder %v501, 0
        %vm528 = vcmp.lt.s32.totalorder %v501, 4
        %vm529 = vmand %vm527, %vm528
        %v530 = vsel %vm529, %v526, 0.0
        %vm531 = vcmask 1040384
        %v532 = vsel %vm531, %v530, 0.0
        %533 = vadd.xlane.f32.xlu0 %v532
        %v534 = vpop.xlane.xlu0 %533
        %v535 = vrot.slane %v534, 4
        %v536 = vadd.f32 %v534, %v535
        %v537 = vrot.slane %v536, 2
        %v538 = vadd.f32 %v536, %v537
        %v539 = vrot.slane %v538, 1
        %v540 = vadd.f32 %v538, %v539
        %s541 = vtos %v540
        %s542 = smul.f32 %s541, 0.001953125
        %v543 = vstv %s542
        %v544 = vsel %vm529, %v543, 0.0
        %vm545 = vcmp.ge.s32.totalorder %v501, 4
        %vm546 = vcmp.lt.s32.totalorder %v501, 8
        %vm547 = vmand %vm545, %vm546
        %v548 = vsel %vm547, %v526, 0.0
        %v549 = vsel %vm531, %v548, 0.0
        %550 = vadd.xlane.f32.xlu0 %v549
        %v551 = vpop.xlane.xlu0 %550
        %v552 = vrot.slane %v551, 4
        %v553 = vadd.f32 %v551, %v552
        %v554 = vrot.slane %v553, 2
        %v555 = vadd.f32 %v553, %v554
        %v556 = vrot.slane %v555, 1
        %v557 = vadd.f32 %v555, %v556
        %s558 = vtos %v557
        %s559 = smul.f32 %s558, 0.001953125
        %v560 = vstv %s559
        %v561 = vsel %vm547, %v560, %v544
        %562 = vst [vmem:[%s252] sm:$0xff] 0.0
        %563 = vst [vmem:[%s252 + $0x2] sm:$0x1] %v561
      $region36: #{basic_conv2d.2} parent=31 // pred_fallthru
        _
      %v564 = vld [vmem:[%s252 + $0x2] sm:$0x1]
      %v565 = vlaneseq
      %v566 = vshrl.u32 %v565, 7
      %v567 = vsub.s32 0, %v566
      %v568 = vrot.slane %v564, %v567
      %v569 = vsub.f32 %v422, %v568
      %v570 = vsub.f32 %v425, %v568
      %v571 = vsub.f32 %v430, %v568
      %v572 = vsub.f32 %v433, %v568
      %v573 = vsub.f32 %v438, %v568
      %v574 = vsub.f32 %v441, %v568
      %v575 = vsub.f32 %v446, %v568
      %v576 = vsub.f32 %v449, %v568
      %v577 = vsub.f32 %v454, %v568
      %v578 = vsub.f32 %v457, %v568
      %v579 = vsub.f32 %v462, %v568
      %v580 = vsub.f32 %v465, %v568
      %v581 = vsub.f32 %v470, %v568
      %v582 = vsub.f32 %v473, %v568
      %v583 = vsub.f32 %v478, %v568
      %v584 = vsub.f32 %v481, %v568
      %v585 = vld [vmem:[%s252] sm:$0x1]
      %v586 = vadd.f32 %v569, %v570
      %v587 = vadd.f32 %v586, %v571
      %v588 = vadd.f32 %v587, %v572
      %v589 = vadd.f32 %v588, %v573
      %v590 = vadd.f32 %v589, %v574
      %v591 = vadd.f32 %v590, %v575
      %v592 = vadd.f32 %v591, %v576
      %v593 = vadd.f32 %v592, %v577
      %v594 = vadd.f32 %v593, %v578
      %v595 = vadd.f32 %v594, %v579
      %v596 = vadd.f32 %v595, %v580
      %v597 = vadd.f32 %v596, %v581
      %v598 = vadd.f32 %v597, %v582
      %v599 = vadd.f32 %v598, %v583
      %v600 = vadd.f32 %v599, %v584
      %v601 = vrot.slane %v600, 4
      %v602 = vadd.f32 %v600, %v601
      %v603 = vrot.slane %v602, 2
      %v604 = vadd.f32 %v602, %v603
      %v605 = vrot.slane %v604, 1
      %v606 = vadd.f32 %v604, %v605
      %v607 = vadd.f32 %v585, %v606
      %608 = vst [vmem:[%s252] sm:$0x1] %v607
      %v609 = vld [vmem:[%s252 + $0x1] sm:$0x1]
      %v610 = vmul.f32 %v569, %v569
      %v611 = vmul.f32 %v570, %v570
      %v612 = vmul.f32 %v571, %v571
      %v613 = vmul.f32 %v572, %v572
      %v614 = vmul.f32 %v573, %v573
      %v615 = vmul.f32 %v574, %v574
      %v616 = vmul.f32 %v575, %v575
      %v617 = vmul.f32 %v576, %v576
      %v618 = vmul.f32 %v577, %v577
      %v619 = vmul.f32 %v578, %v578
      %v620 = vmul.f32 %v579, %v579
      %v621 = vmul.f32 %v580, %v580
      %v622 = vmul.f32 %v581, %v581
      %v623 = vmul.f32 %v582, %v582
      %v624 = vmul.f32 %v583, %v583
      %v625 = vmul.f32 %v584, %v584
      %v626 = vadd.f32 %v610, %v611
      %v627 = vadd.f32 %v626, %v612
      %v628 = vadd.f32 %v627, %v613
      %v629 = vadd.f32 %v628, %v614
      %v630 = vadd.f32 %v629, %v615
      %v631 = vadd.f32 %v630, %v616
      %v632 = vadd.f32 %v631, %v617
      %v633 = vadd.f32 %v632, %v618
      %v634 = vadd.f32 %v633, %v619
      %v635 = vadd.f32 %v634, %v620
      %v636 = vadd.f32 %v635, %v621
      %v637 = vadd.f32 %v636, %v622
      %v638 = vadd.f32 %v637, %v623
      %v639 = vadd.f32 %v638, %v624
      %v640 = vadd.f32 %v639, %v625
      %v641 = vrot.slane %v640, 4
      %v642 = vadd.f32 %v640, %v641
      %v643 = vrot.slane %v642, 2
      %v644 = vadd.f32 %v642, %v643
      %v645 = vrot.slane %v644, 1
      %v646 = vadd.f32 %v644, %v645
      %v647 = vadd.f32 %v609, %v646
      %648 = vst [vmem:[%s252 + $0x1] sm:$0x1] %v647
      %s649 = smul.u32 8, %s21
      %p650 = scmp.lt.s32.totalorder %s20, 1
      %s651 = scalar_select %p650, %s20, 1
      %p652 = scmp.lt.s32.totalorder %s649, 15
      %s653 = scalar_select %p652, %s649, 15
      %s654 = smul.addr %s653, 2
      %s655 = smul.addr %s651, 32
      %s656 = sadd.s32 %s654, %s655
      %s657 = smul.addr %s656, 8
      %s658 = scalar_lea.vmem %s3, %s657
      %p659 = scmp.lt.s32.totalorder %s20, 1
      %s660 = scalar_select %p659, %s20, 1
      %s661 = smul.addr %s660, 8
      %s662 = scalar_lea.vmem %s4, %s661
      // Predicated region
      $region37: #{basic_conv2d.2} parent=31 // pred_check
        %p663 = pneg %p118
      $region38: #{basic_conv2d.2} parent=31 // pred_check_branch
        %665 = sbr.rel (%p663) target = $region40
      $region39: #{basic_conv2d.2} parent=31 // pred_region
        %s666 = smul.u32 8, %s21
      $region40: #{basic_conv2d.2} parent=31 // pred_fallthru
        _
      // Predicated region
      $region41: #{basic_conv2d.2} parent=31 // pred_check
        %p667 = pneg %p144
      $region42: #{basic_conv2d.2} parent=31 // pred_check_branch
        %669 = sbr.rel (%p667) target = $region44
      $region43: #{basic_conv2d.2} parent=31 // pred_region
        _
      $region44: #{basic_conv2d.2} parent=31 // pred_fallthru
        _
    $region32: #{basic_conv2d.2} parent=5 // pred_fallthru
      _
    %p670 = scmp.le.s32.totalorder 2, %s11
    // Predicated region
    $region45: #{basic_conv2d.2} parent=5 // pred_check
      %p671 = pneg %p670
    $region46: #{basic_conv2d.2} parent=5 // pred_check_branch
      %673 = sbr.rel (%p671) target = $region48
    $region47: #{basic_conv2d.2} parent=5 // pred_region
      %s674 = ssub.s32 %s11, 2
      // Predicated region
      $region49: #{basic_conv2d.2} parent=47 // pred_check
        %p675 = pneg %p124
      $region50: #{basic_conv2d.2} parent=47 // pred_check_branch
        %677 = sbr.rel (%p675) target = $region52
      $region51: #{basic_conv2d.2} parent=47 // pred_region
        %s678 = smul.u32 8, %s23
        %p679 = scmp.lt.s32.totalorder %s22, 1
        %s680 = scalar_select %p679, %s22, 1
        %p681 = scmp.lt.s32.totalorder %s678, 15
        %s682 = scalar_select %p681, %s678, 15
        %s683 = smul.addr %s682, 2
        %s684 = smul.addr %s680, 32
        %s685 = sadd.s32 %s683, %s684
        %s686 = smul.addr %s685, 8
        %s687 = scalar_lea.vmem %s3, %s686
      $region52: #{basic_conv2d.2} parent=47 // pred_fallthru
        _
      // Predicated region
      $region53: #{basic_conv2d.2} parent=47 // pred_check
        %p688 = pneg %p150
      $region54: #{basic_conv2d.2} parent=47 // pred_check_branch
        %690 = sbr.rel (%p688) target = $region56
      $region55: #{basic_conv2d.2} parent=47 // pred_region
        %p691 = scmp.lt.s32.totalorder %s22, 1
        %s692 = scalar_select %p691, %s22, 1
        %s693 = smul.addr %s692, 8
        %s694 = scalar_lea.vmem %s4, %s693
      $region56: #{basic_conv2d.2} parent=47 // pred_fallthru
        _
    $region48: #{basic_conv2d.2} parent=5 // pred_fallthru
      _
  $region6: #{basic_conv2d.2} parent=0 // loop_footer
    %s15 = sadd.s32 1, %s11
  $region7: #{basic_conv2d.2} parent=0 // loop_footer_branch
    %10 = sbr.rel target = $region3
  $region8: #{basic_conv2d.2} parent=0 // loop_exit
    _

// kernel: basic_conv2d.3
$region0: #{basic_conv2d.3}
  #allocation0 [shape = 'u32[]', space=smem, size = 0x4, offset = 0x4, fixed_abs, tag = 'smem constant byte address 0x4 - core index']
  #allocation1 [shape = 'u32[144,128]{1,0:T(1,128)}', space=vmem, size = 0x12000, scoped, tag = 'internal scratch']
  %s0 = inlined_call_operand.vmem [shape: f32[2,16,16,128], index: 0, kind: input, shape index: {}]
  %s1 = inlined_call_operand.vmem [shape: f32[2,8,128], index: 1, kind: input, shape index: {}]
  %s2 = inlined_call_operand.vmem [shape: f32[2,16,16,128], index: 2, kind: output, shape index: {}]
  %s3 = sld [smem:[#allocation0]]
  $region41: #{basic_conv2d.3} parent=0
    _
  %s5 = ssub.s32 1, %s3
  %s6 = scalar_select 0, %s5, %s3
  loop: start=0, step=1, limit=6
  $region2: #{basic_conv2d.3} parent=0 // loop_pre_header
    _
  $region3: #{basic_conv2d.3} parent=0 // loop_header
    %s8 = sphi 0, %s12
    %p9 = scmp.ge.s32.totalorder %s8, 6
    %s15 = sphi 0, %s27
    %s16 = sphi 0, %s23
    %s17 = sphi 0, %s15
    %s18 = sphi 0, %s16
    %s19 = sphi 0, %s17
    %s20 = sphi 0, %s18
    %s32 = sphi 0, %s34
    %s35 = sphi 0, %s32
    %s36 = sphi 0, %s35
    %s52 = sphi 0, %s36
    %s58 = sphi 0, %s60
    %s61 = sphi 0, %s58
    %s62 = sphi 0, %s61
    %s78 = sphi 0, %s62
    %s86 = sphi 0, %s88
    %s89 = sphi 0, %s86
    %s90 = sphi 0, %s89
    %s106 = sphi 0, %s90
  $region4: #{basic_conv2d.3} parent=0 // loop_header_branch
    %11 = sbr.rel (%p9) target = $region8
  $region5: #{basic_conv2d.3} parent=0 // loop_body
    %s13 = ssub.s32 %s8, 1
    %s14 = ssub.s32 %s8, 2
    %s21 = sadd.s32 1, %s16
    %p22 = scmp.ge.s32.totalorder %s21, 2
    %s23 = scalar_select %p22, 0, %s21
    %s24 = sadd.s32 1, %s15
    %s25 = scalar_select %p22, %s24, %s15
    %p26 = scmp.ge.s32.totalorder %s25, 2
    %s27 = scalar_select %p26, 0, %s25
    %s28 = ssub.s32 %s15, %s27
    %s29 = ssub.s32 %s16, %s23
    %s30 = sor.u32 %s28, %s29
    %p31 = scmp.eq.s32.totalorder %s30, 0
    %s33 = sadd.s32 %s32, 1
    %s34 = scalar_select %p31, %s32, %s33
    %p37 = pneg %p31
    %p38 = scmp.eq.s32.totalorder %s8, 3
    %p39 = por %p37, %p38
    %p40 = scmp.ne.s32.totalorder %s32, %s35
    %p41 = scmp.eq.s32.totalorder %s8, 0
    %p42 = por %p40, %p41
    %p43 = scmp.ne.s32.totalorder %s32, %s35
    %p44 = scmp.eq.s32.totalorder %s13, 3
    %p45 = por %p43, %p44
    %p46 = scmp.ne.s32.totalorder %s35, %s36
    %p47 = scmp.eq.s32.totalorder %s13, 0
    %p48 = por %p46, %p47
    %p49 = scmp.ne.s32.totalorder %s35, %s36
    %p50 = scmp.eq.s32.totalorder %s14, 3
    %p51 = por %p49, %p50
    %p53 = scmp.ne.s32.totalorder %s36, %s52
    %p54 = scmp.eq.s32.totalorder %s14, 0
    %p55 = por %p53, %p54
    %s56 = ssub.s32 %s15, %s27
    %p57 = scmp.eq.s32.totalorder %s56, 0
    %s59 = sadd.s32 %s58, 1
    %s60 = scalar_select %p57, %s58, %s59
    %p63 = pneg %p57
    %p64 = scmp.eq.s32.totalorder %s8, 3
    %p65 = por %p63, %p64
    %p66 = scmp.ne.s32.totalorder %s58, %s61
    %p67 = scmp.eq.s32.totalorder %s8, 0
    %p68 = por %p66, %p67
    %p69 = scmp.ne.s32.totalorder %s58, %s61
    %p70 = scmp.eq.s32.totalorder %s13, 3
    %p71 = por %p69, %p70
    %p72 = scmp.ne.s32.totalorder %s61, %s62
    %p73 = scmp.eq.s32.totalorder %s13, 0
    %p74 = por %p72, %p73
    %p75 = scmp.ne.s32.totalorder %s61, %s62
    %p76 = scmp.eq.s32.totalorder %s14, 3
    %p77 = por %p75, %p76
    %p79 = scmp.ne.s32.totalorder %s62, %s78
    %p80 = scmp.eq.s32.totalorder %s14, 0
    %p81 = por %p79, %p80
    %s82 = ssub.s32 %s15, %s27
    %s83 = ssub.s32 %s16, %s23
    %s84 = sor.u32 %s82, %s83
    %p85 = scmp.eq.s32.totalorder %s84, 0
    %s87 = sadd.s32 %s86, 1
    %s88 = scalar_select %p85, %s86, %s87
    %p91 = pneg %p85
    %p92 = scmp.eq.s32.totalorder %s8, 3
    %p93 = por %p91, %p92
    %p94 = scmp.ne.s32.totalorder %s86, %s89
    %p95 = scmp.eq.s32.totalorder %s8, 0
    %p96 = por %p94, %p95
    %p97 = scmp.ne.s32.totalorder %s86, %s89
    %p98 = scmp.eq.s32.totalorder %s13, 3
    %p99 = por %p97, %p98
    %p100 = scmp.ne.s32.totalorder %s89, %s90
    %p101 = scmp.eq.s32.totalorder %s13, 0
    %p102 = por %p100, %p101
    %p103 = scmp.ne.s32.totalorder %s89, %s90
    %p104 = scmp.eq.s32.totalorder %s14, 3
    %p105 = por %p103, %p104
    %p107 = scmp.ne.s32.totalorder %s90, %s106
    %p108 = scmp.eq.s32.totalorder %s14, 0
    %p109 = por %p107, %p108
    %p110 = scmp.le.s32.totalorder 1, %s8
    %p111 = scmp.lt.s32.totalorder %s8, 5
    %p112 = pnand %p110, %p111
    %p113 = pneg %p112
    // Predicated region
    $region9: #{basic_conv2d.3} parent=5 // pred_check
      _
    $region10: #{basic_conv2d.3} parent=5 // pred_check_branch
      %115 = sbr.rel (%p112) target = $region12
    $region11: #{basic_conv2d.3} parent=5 // pred_region
      %s116 = ssub.s32 %s8, 1
    $region12: #{basic_conv2d.3} parent=5 // pred_fallthru
      _
    %p117 = scmp.lt.s32.totalorder %s8, 4
    // Predicated region
    $region13: #{basic_conv2d.3} parent=5 // pred_check
      %p118 = pneg %p117
    $region14: #{basic_conv2d.3} parent=5 // pred_check_branch
      %120 = sbr.rel (%p118) target = $region16
    $region15: #{basic_conv2d.3} parent=5 // pred_region
      // Predicated region
      $region17: #{basic_conv2d.3} parent=15 // pred_check
        %p121 = pneg %p42
      $region18: #{basic_conv2d.3} parent=15 // pred_check_branch
        %123 = sbr.rel (%p121) target = $region20
      $region19: #{basic_conv2d.3} parent=15 // pred_region
        %s124 = smul.u32 8, %s16
        %p125 = scmp.lt.s32.totalorder %s15, 1
        %s126 = scalar_select %p125, %s15, 1
        %p127 = scmp.lt.s32.totalorder %s124, 15
        %s128 = scalar_select %p127, %s124, 15
        %s129 = smul.addr %s128, 2
        %s130 = smul.addr %s126, 32
        %s131 = sadd.s32 %s129, %s130
        %s132 = smul.addr %s131, 8
        %s133 = scalar_lea.vmem %s0, %s132
        %s134 = smul.u32 8, %s16
      $region20: #{basic_conv2d.3} parent=15 // pred_fallthru
        _
      // Predicated region
      $region21: #{basic_conv2d.3} parent=15 // pred_check
        %p135 = pneg %p68
      $region22: #{basic_conv2d.3} parent=15 // pred_check_branch
        %137 = sbr.rel (%p135) target = $region24
      $region23: #{basic_conv2d.3} parent=15 // pred_region
        %p138 = scmp.lt.s32.totalorder %s15, 1
        %s139 = scalar_select %p138, %s15, 1
        %s140 = smul.addr %s139, 8
        %s141 = scalar_lea.vmem %s1, %s140
      $region24: #{basic_conv2d.3} parent=15 // pred_fallthru
        _
    $region16: #{basic_conv2d.3} parent=5 // pred_fallthru
      _
    %p142 = scmp.le.s32.totalorder 1, %s8
    %p143 = scmp.lt.s32.totalorder %s8, 5
    %p144 = pnand %p142, %p143
    %p145 = pneg %p144
    // Predicated region
    $region25: #{basic_conv2d.3} parent=5 // pred_check
      _
    $region26: #{basic_conv2d.3} parent=5 // pred_check_branch
      %147 = sbr.rel (%p144) target = $region28
    $region27: #{basic_conv2d.3} parent=5 // pred_region
      %s148 = ssub.s32 %s8, 1
      %s149 = smul.u32 8, %s18
      %p150 = scmp.lt.s32.totalorder %s17, 1
      %s151 = scalar_select %p150, %s17, 1
      %p152 = scmp.lt.s32.totalorder %s149, 15
      %s153 = scalar_select %p152, %s149, 15
      %s154 = smul.addr %s153, 2
      %s155 = smul.addr %s151, 32
      %s156 = sadd.s32 %s154, %s155
      %s157 = smul.addr %s156, 8
      %s158 = scalar_lea.vmem %s0, %s157
      %p159 = pneg %p48
      %p160 = pneg %p45
      %p161 = scmp.lt.s32.totalorder %s17, 1
      %s162 = scalar_select %p161, %s17, 1
      %s163 = smul.addr %s162, 8
      %s164 = scalar_lea.vmem %s1, %s163
      %p165 = pneg %p74
      %p166 = pneg %p71
      %p167 = pneg %p102
      %p168 = pneg %p99
      %s169 = smul.u32 8, %s18
      %p170 = scmp.lt.s32.totalorder %s17, 1
      %s171 = scalar_select %p170, %s17, 1
      %p172 = scmp.lt.s32.totalorder %s169, 15
      %s173 = scalar_select %p172, %s169, 15
      %s174 = smul.addr %s173, 2
      %s175 = smul.addr %s171, 32
      %s176 = sadd.s32 %s174, %s175
      %s177 = smul.addr %s176, 8
      %s178 = scalar_lea.vmem %s2, %s177
      %s179 = smul.u32 8, %s18
      %p180 = scmp.lt.s32.totalorder %s17, 1
      %s181 = scalar_select %p180, %s17, 1
      %p182 = scmp.lt.s32.totalorder %s179, 15
      %s183 = scalar_select %p182, %s179, 15
      %s184 = smul.addr %s183, 2
      %s185 = smul.addr %s181, 32
      %s186 = sadd.s32 %s184, %s185
      %s187 = smul.addr %s186, 8
      %s188 = scalar_lea.vmem %s0, %s187
      %s189 = smul.u32 8, %s18
      %p190 = scmp.lt.s32.totalorder %s17, 1
      %s191 = scalar_select %p190, %s17, 1
      %s192 = smul.addr %s191, 8
      %s193 = scalar_lea.vmem %s1, %s192
      %s194 = smul.u32 8, %s18
      %p195 = scmp.lt.s32.totalorder %s17, 1
      %s196 = scalar_select %p195, %s17, 1
      %p197 = scmp.lt.s32.totalorder %s194, 15
      %s198 = scalar_select %p197, %s194, 15
      %s199 = smul.addr %s198, 2
      %s200 = smul.addr %s196, 32
      %s201 = sadd.s32 %s199, %s200
      %s202 = smul.addr %s201, 8
      %s203 = scalar_lea.vmem %s2, %s202
      %s204 = smul.u32 8, %s18
      %v205 = vld [vmem:[%s188] sm:$0xff]
      %v206 = vld [vmem:[%s188 + $0x8] sm:$0xff]
      %v207 = vld [vmem:[%s188 + $0x10] sm:$0xff]
      %v208 = vld [vmem:[%s188 + $0x18] sm:$0xff]
      %v209 = vld [vmem:[%s188 + $0x20] sm:$0xff]
      %v210 = vld [vmem:[%s188 + $0x28] sm:$0xff]
      %v211 = vld [vmem:[%s188 + $0x30] sm:$0xff]
      %v212 = vld [vmem:[%s188 + $0x38] sm:$0xff]
      %v213 = vld [vmem:[%s188 + $0x40] sm:$0xff]
      %v214 = vld [vmem:[%s188 + $0x48] sm:$0xff]
      %v215 = vld [vmem:[%s188 + $0x50] sm:$0xff]
      %v216 = vld [vmem:[%s188 + $0x58] sm:$0xff]
      %v217 = vld [vmem:[%s188 + $0x60] sm:$0xff]
      %v218 = vld [vmem:[%s188 + $0x68] sm:$0xff]
      %v219 = vld [vmem:[%s188 + $0x70] sm:$0xff]
      %v220 = vld [vmem:[%s188 + $0x78] sm:$0xff]
      %v221 = vld [vmem:[%s193] sm:$0x1]
      %v222 = vld [vmem:[%s193 + $0x1] sm:$0x1]
      %v223 = vlaneseq
      %v224 = vshrl.u32 %v223, 7
      %v225 = vsub.s32 0, %v224
      %v226 = vrot.slane %v221, %v225
      %v227 = vmul.f32 %v205, %v226
      %v228 = vmul.f32 %v206, %v226
      %v229 = vmul.f32 %v207, %v226
      %v230 = vmul.f32 %v208, %v226
      %v231 = vmul.f32 %v209, %v226
      %v232 = vmul.f32 %v210, %v226
      %v233 = vmul.f32 %v211, %v226
      %v234 = vmul.f32 %v212, %v226
      %v235 = vmul.f32 %v213, %v226
      %v236 = vmul.f32 %v214, %v226
      %v237 = vmul.f32 %v215, %v226
      %v238 = vmul.f32 %v216, %v226
      %v239 = vmul.f32 %v217, %v226
      %v240 = vmul.f32 %v218, %v226
      %v241 = vmul.f32 %v219, %v226
      %v242 = vmul.f32 %v220, %v226
      %v243 = vlaneseq
      %v244 = vshrl.u32 %v243, 7
      %v245 = vsub.s32 0, %v244
      %v246 = vrot.slane %v222, %v245
      %v247 = vadd.f32 %v227, %v246
      %v248 = vadd.f32 %v228, %v246
      %v249 = vadd.f32 %v229, %v246
      %v250 = vadd.f32 %v230, %v246
      %v251 = vadd.f32 %v231, %v246
      %v252 = vadd.f32 %v232, %v246
      %v253 = vadd.f32 %v233, %v246
      %v254 = vadd.f32 %v234, %v246
      %v255 = vadd.f32 %v235, %v246
      %v256 = vadd.f32 %v236, %v246
      %v257 = vadd.f32 %v237, %v246
      %v258 = vadd.f32 %v238, %v246
      %v259 = vadd.f32 %v239, %v246
      %v260 = vadd.f32 %v240, %v246
      %v261 = vadd.f32 %v241, %v246
      %v262 = vadd.f32 %v242, %v246
      %v263 = vmul.f32 %v247, 0.2
      %v264 = vmul.f32 %v248, 0.2
      %v265 = vmul.f32 %v249, 0.2
      %v266 = vmul.f32 %v250, 0.2
      %v267 = vmul.f32 %v251, 0.2
      %v268 = vmul.f32 %v252, 0.2
      %v269 = vmul.f32 %v253, 0.2
      %v270 = vmul.f32 %v254, 0.2
      %v271 = vmul.f32 %v255, 0.2
      %v272 = vmul.f32 %v256, 0.2
      %v273 = vmul.f32 %v257, 0.2
      %v274 = vmul.f32 %v258, 0.2
      %v275 = vmul.f32 %v259, 0.2
      %v276 = vmul.f32 %v260, 0.2
      %v277 = vmul.f32 %v261, 0.2
      %v278 = vmul.f32 %v262, 0.2
      %v279 = vmax.f32 %v247, %v263
      %v280 = vmax.f32 %v248, %v264
      %v281 = vmax.f32 %v249, %v265
      %v282 = vmax.f32 %v250, %v266
      %v283 = vmax.f32 %v251, %v267
      %v284 = vmax.f32 %v252, %v268
      %v285 = vmax.f32 %v253, %v269
      %v286 = vmax.f32 %v254, %v270
      %v287 = vmax.f32 %v255, %v271
      %v288 = vmax.f32 %v256, %v272
      %v289 = vmax.f32 %v257, %v273
      %v290 = vmax.f32 %v258, %v274
      %v291 = vmax.f32 %v259, %v275
      %v292 = vmax.f32 %v260, %v276
      %v293 = vmax.f32 %v261, %v277
      %v294 = vmax.f32 %v262, %v278
      %295 = vst [vmem:[%s203] sm:$0xff] %v279
      %296 = vst [vmem:[%s203 + $0x8] sm:$0xff] %v280
      %297 = vst [vmem:[%s203 + $0x10] sm:$0xff] %v281
      %298 = vst [vmem:[%s203 + $0x18] sm:$0xff] %v282
      %299 = vst [vmem:[%s203 + $0x20] sm:$0xff] %v283
      %300 = vst [vmem:[%s203 + $0x28] sm:$0xff] %v284
      %301 = vst [vmem:[%s203 + $0x30] sm:$0xff] %v285
      %302 = vst [vmem:[%s203 + $0x38] sm:$0xff] %v286
      %303 = vst [vmem:[%s203 + $0x40] sm:$0xff] %v287
      %304 = vst [vmem:[%s203 + $0x48] sm:$0xff] %v288
      %305 = vst [vmem:[%s203 + $0x50] sm:$0xff] %v289
      %306 = vst [vmem:[%s203 + $0x58] sm:$0xff] %v290
      %307 = vst [vmem:[%s203 + $0x60] sm:$0xff] %v291
      %308 = vst [vmem:[%s203 + $0x68] sm:$0xff] %v292
      %309 = vst [vmem:[%s203 + $0x70] sm:$0xff] %v293
      %310 = vst [vmem:[%s203 + $0x78] sm:$0xff] %v294
      %s311 = smul.u32 8, %s18
      %p312 = scmp.lt.s32.totalorder %s17, 1
      %s313 = scalar_select %p312, %s17, 1
      %p314 = scmp.lt.s32.totalorder %s311, 15
      %s315 = scalar_select %p314, %s311, 15
      %s316 = smul.addr %s315, 2
      %s317 = smul.addr %s313, 32
      %s318 = sadd.s32 %s316, %s317
      %s319 = smul.addr %s318, 8
      %s320 = scalar_lea.vmem %s2, %s319
      // Predicated region
      $region29: #{basic_conv2d.3} parent=27 // pred_check
        %p321 = pneg %p99
      $region30: #{basic_conv2d.3} parent=27 // pred_check_branch
        %323 = sbr.rel (%p321) target = $region32
      $region31: #{basic_conv2d.3} parent=27 // pred_region
        %s324 = smul.u32 8, %s18
      $region32: #{basic_conv2d.3} parent=27 // pred_fallthru
        _
    $region28: #{basic_conv2d.3} parent=5 // pred_fallthru
      _
    %p325 = scmp.le.s32.totalorder 2, %s8
    // Predicated region
    $region33: #{basic_conv2d.3} parent=5 // pred_check
      %p326 = pneg %p325
    $region34: #{basic_conv2d.3} parent=5 // pred_check_branch
      %328 = sbr.rel (%p326) target = $region36
    $region35: #{basic_conv2d.3} parent=5 // pred_region
      %s329 = ssub.s32 %s8, 2
      // Predicated region
      $region37: #{basic_conv2d.3} parent=35 // pred_check
        %p330 = pneg %p105
      $region38: #{basic_conv2d.3} parent=35 // pred_check_branch
        %332 = sbr.rel (%p330) target = $region40
      $region39: #{basic_conv2d.3} parent=35 // pred_region
        %s333 = smul.u32 8, %s20
        %p334 = scmp.lt.s32.totalorder %s19, 1
        %s335 = scalar_select %p334, %s19, 1
        %p336 = scmp.lt.s32.totalorder %s333, 15
        %s337 = scalar_select %p336, %s333, 15
        %s338 = smul.addr %s337, 2
        %s339 = smul.addr %s335, 32
        %s340 = sadd.s32 %s338, %s339
        %s341 = smul.addr %s340, 8
        %s342 = scalar_lea.vmem %s2, %s341
      $region40: #{basic_conv2d.3} parent=35 // pred_fallthru
        _
    $region36: #{basic_conv2d.3} parent=5 // pred_fallthru
      _
  $region6: #{basic_conv2d.3} parent=0 // loop_footer
    %s12 = sadd.s32 1, %s8
  $region7: #{basic_conv2d.3} parent=0 // loop_footer_branch
    %7 = sbr.rel target = $region3
  $region8: #{basic_conv2d.3} parent=0 // loop_exit
    _

</llo_original>
